<compile_context>
chip_gen: v7x
topology: tpu7x:2x2x1
jax: 0.10.0
libtpu: 0.0.40
codegen_flags: <defaults>
</compile_context>

<pallas_src>
import jax
import jax.numpy as jnp
from jax.experimental import pallas as pl
from jax.experimental.pallas import tpu as pltpu


EPS = 1e-6


def _encoder_norm_kernel(alpha_ref, bias_ref, x_ref, o_ref):
    """LayerNormalization over the last axis of one (TR, D) row block.

    alpha_ref / bias_ref: scalar parameters in SMEM, shape (1,).
    x_ref / o_ref: (TR, D) VMEM tiles; the reduction runs over the lane axis.
    """
    x = x_ref[...].astype(jnp.float32)
    d = x.shape[-1]

    # Two-pass form: mean, then centered sum of squares with the unbiased
    # (D - 1) divisor -- exactly torch.std's default.  (D == 1 yields inf/nan,
    # matching torch's behavior.)
    mean = jnp.mean(x, axis=-1, keepdims=True)
    var = jnp.sum((x - mean) * (x - mean), axis=-1, keepdims=True) / (d - 1)
    std = jnp.sqrt(var)

    # Scalars read once (SMEM); the divide hoisted to one reciprocal per row.
    # Folded affine epilogue: out = x * scale + shift (no reuse of `centered`).
    alpha = alpha_ref[0]
    bias = bias_ref[0]
    scale = alpha * pl.reciprocal(std + EPS)         # (TR, 1), exact
    shift = bias - mean * scale                      # (TR, 1)
    o_ref[...] = (x * scale + shift).astype(o_ref.dtype)


def _encoder_norm_xla(x, alpha, bias):
    """Plain-XLA path for tiny hidden sizes (D < 128)."""
    mean = jnp.mean(x, axis=-1, keepdims=True)
    std = jnp.std(x, axis=-1, keepdims=True, ddof=1)  # torch.std is unbiased
    return alpha[0] * (x - mean) / (std + EPS) + bias[0]


def _sublane_multiple(dtype):
    """Native sublane packing for the dtype: 8 (>=32-bit), 16 (16-bit), 32 (8-bit)."""
    itemsize = jnp.dtype(dtype).itemsize
    if itemsize >= 4:
        return 8
    if itemsize == 2:
        return 16
    return 32


def _vmem_budget_and_limit():
    """Tile budget and vmem_limit_bytes adapted to the chip's VMEM capacity."""
    try:
        cap = int(pltpu.get_tpu_info().vmem_capacity_bytes)
    except Exception:
        cap = 64 * 1024 * 1024                       # conservative (v7x)
    budget = max(16 * 1024 * 1024, cap // 3)
    limit = min(cap * 3 // 4, max(32 * 1024 * 1024, 2 * budget))
    return budget, int(limit)


def _pick_row_tile(n_rows, d, dtype, budget_bytes):
    """Rows per grid step: largest tile whose full working set fits the budget,
    while keeping >= 2 grid steps so both v7x TensorCores get work."""
    sub = _sublane_multiple(dtype)
    itemsize = max(int(jnp.dtype(dtype).itemsize), 1)
    # 2x double-buffered input + 2x double-buffered output (native dtype)
    # + ~2 full-tile f32 temporaries inside the body (f32 upcast, centered).
    bytes_per_row = d * (4 * itemsize + 2 * 4)
    tr = budget_bytes // bytes_per_row
    tr = min(tr, 2048)
    # Never collapse to a single grid step when it can be avoided (megacore).
    tr = min(tr, pl.cdiv(n_rows, 2))
    tr = max(sub, (tr // sub) * sub)                 # sublane-packed rounding
    return min(tr, n_rows)                           # full extent always legal


def encoder_forward(x, mask, alpha, bias, *, row_tile=None):
    """JAX/Pallas equivalent of Encoder.forward(x, mask).

    x:     (B, S, D)
    mask:  unused (layer list is empty), kept for signature parity
    alpha: (1,) float32  -- LayerNormalization.alpha
    bias:  (1,) float32  -- LayerNormalization.bias
    """
    del mask  # only consumed by the (empty) layer stack

    B, S, D = x.shape

    # Tiny hidden sizes waste most of every vreg -- route those through XLA.
    # Any D >= 128 stays on the Pallas path (full-extent lane dim is legal for
    # non-multiples of 128; only the trailing vreg's lanes are masked).
    if D < 128:
        return _encoder_norm_xla(x, alpha, bias)

    n_rows = B * S
    x2d = x.reshape(n_rows, D)
    budget_bytes, vmem_limit = _vmem_budget_and_limit()
    tr = row_tile if row_tile is not None else _pick_row_tile(
        n_rows, D, x.dtype, budget_bytes)
    grid = (pl.cdiv(n_rows, tr),)

    out2d = pl.pallas_call(
        _encoder_norm_kernel,
        out_shape=jax.ShapeDtypeStruct((n_rows, D), x.dtype),
        grid=grid,
        in_specs=[
            pl.BlockSpec(memory_space=pltpu.MemorySpace.SMEM),   # alpha
            pl.BlockSpec(memory_space=pltpu.MemorySpace.SMEM),   # bias
            pl.BlockSpec((tr, D), lambda i: (i, 0)),             # x row tile
        ],
        out_specs=pl.BlockSpec((tr, D), lambda i: (i, 0)),
        compiler_params=pltpu.CompilerParams(
            dimension_semantics=("parallel",),                   # megacore-shardable
            vmem_limit_bytes=vmem_limit,
        ),
        cost_estimate=pl.CostEstimate(
            flops=7 * n_rows * D,
            transcendentals=2 * n_rows,                          # sqrt + recip per row
            bytes_accessed=2 * n_rows * D * x.dtype.itemsize,
        ),
    )(alpha, bias, x2d)
    return out2d.reshape(B, S, D)


def encoder_reference(x, mask, alpha, bias):
    """Pure-JAX reference matching the PyTorch forward exactly."""
    del mask
    return _encoder_norm_xla(x, alpha, bias)


if __name__ == "__main__":
    key = jax.random.PRNGKey(0)
    kx, kx2 = jax.random.split(key)

    # Deterministic parameter init, matching nn.Parameter(torch.ones(1)/zeros(1))
    alpha = jnp.ones((1,), dtype=jnp.float32)
    bias = jnp.zeros((1,), dtype=jnp.float32)

    # --- lane-dense hidden size (multiple of 128) ---
    B, S, D = 2, 8, 128
    x = jax.random.normal(kx, (B, S, D), dtype=jnp.float32)
    mask = jnp.ones((B, 1, S, S), dtype=jnp.float32)  # attention-style mask (unused)

    ref = encoder_reference(x, mask, alpha, bias)

    # Default tiling: tr is capped at ceil(n_rows/2), so this already runs a
    # 2-step (megacore-splittable) pipeline.
    out = encoder_forward(x, mask, alpha, bias)
    jax.block_until_ready(out)
    assert out.shape == (B, S, D)
    assert jnp.allclose(out, ref, atol=1e-5, rtol=1e-5), "mismatch vs reference"

    # Single full-extent block (row_tile = n_rows) to exercise that path too.
    out_full = encoder_forward(x, mask, alpha, bias, row_tile=B * S)
    jax.block_until_ready(out_full)
    assert jnp.allclose(out_full, ref, atol=1e-5, rtol=1e-5), "full-block mismatch"

    # --- non-multiple-of-128 hidden size stays on the Pallas path ---
    D2 = 160
    x2 = jax.random.normal(kx2, (B, S, D2), dtype=jnp.float32)
    ref2 = encoder_reference(x2, mask, alpha, bias)
    out2 = encoder_forward(x2, mask, alpha, bias)
    jax.block_until_ready(out2)
    assert out2.shape == (B, S, D2)
    assert jnp.allclose(out2, ref2, atol=1e-5, rtol=1e-5), "ragged-D mismatch"

    print("KERNEL_OK")
</pallas_src>

<mosaic_0001>
module attributes {stable_mosaic.version = 11 : i64} {
  func.func @_encoder_norm_kernel(%arg0: i32, %arg1: memref<1xf32, #tpu.memory_space<smem>>, %arg2: memref<1xf32, #tpu.memory_space<smem>>, %arg3: memref<8x128xf32, #tpu.memory_space<vmem>>, %arg4: memref<8x128xf32, #tpu.memory_space<vmem>>) attributes {dimension_semantics = [#tpu.dimension_semantics<parallel>], iteration_bounds = array<i64: 2>, scalar_prefetch = 0 : i64, scratch_operands = 0 : i64, tpu.core_type = #tpu.core_type<tc>, window_params = [{transform_indices = @transform_0, window_bounds = array<i64: 1>}, {transform_indices = @transform_1, window_bounds = array<i64: 1>}, {transform_indices = @transform_2, window_bounds = array<i64: 8, 128>}, {transform_indices = @transform_3, window_bounds = array<i64: 8, 128>}]} {
    %c0 = arith.constant 0 : index
    %c0_0 = arith.constant 0 : index
    %0 = vector.load %arg3[%c0, %c0_0] : memref<8x128xf32, #tpu.memory_space<vmem>>, vector<8x128xf32>
    %cst = arith.constant dense<0.000000e+00> : vector<8xf32>
    %1 = vector.multi_reduction <add>, %0, %cst [1] : vector<8x128xf32> to vector<8xf32>
    %2 = vector.shape_cast %1 : vector<8xf32> to vector<8x1xf32>
    %cst_1 = arith.constant 1.280000e+02 : f32
    %3 = vector.broadcast %cst_1 : f32 to vector<8x1xf32>
    %4 = arith.divf %2, %3 : vector<8x1xf32>
    %5 = vector.broadcast %4 : vector<8x1xf32> to vector<8x128xf32>
    %6 = arith.subf %0, %5 : vector<8x128xf32>
    %7 = vector.broadcast %4 : vector<8x1xf32> to vector<8x128xf32>
    %8 = arith.subf %0, %7 : vector<8x128xf32>
    %9 = arith.mulf %6, %8 : vector<8x128xf32>
    %cst_2 = arith.constant dense<0.000000e+00> : vector<8xf32>
    %10 = vector.multi_reduction <add>, %9, %cst_2 [1] : vector<8x128xf32> to vector<8xf32>
    %11 = vector.shape_cast %10 : vector<8xf32> to vector<8x1xf32>
    %cst_3 = arith.constant 1.270000e+02 : f32
    %12 = vector.broadcast %cst_3 : f32 to vector<8x1xf32>
    %13 = arith.divf %11, %12 : vector<8x1xf32>
    %14 = math.sqrt %13 : vector<8x1xf32>
    %c0_4 = arith.constant 0 : index
    %15 = memref.load %arg1[%c0_4] : memref<1xf32, #tpu.memory_space<smem>>
    %c0_5 = arith.constant 0 : index
    %16 = memref.load %arg2[%c0_5] : memref<1xf32, #tpu.memory_space<smem>>
    %cst_6 = arith.constant 9.99999997E-7 : f32
    %17 = vector.broadcast %cst_6 : f32 to vector<8x1xf32>
    %18 = arith.addf %14, %17 : vector<8x1xf32>
    %19 = tpu.reciprocal %18 : vector<8x1xf32> -> vector<8x1xf32>
    %20 = vector.broadcast %15 : f32 to vector<8x1xf32>
    %21 = arith.mulf %20, %19 : vector<8x1xf32>
    %22 = arith.mulf %4, %21 : vector<8x1xf32>
    %23 = vector.broadcast %16 : f32 to vector<8x1xf32>
    %24 = arith.subf %23, %22 : vector<8x1xf32>
    %25 = vector.broadcast %21 : vector<8x1xf32> to vector<8x128xf32>
    %26 = arith.mulf %0, %25 : vector<8x128xf32>
    %27 = vector.broadcast %24 : vector<8x1xf32> to vector<8x128xf32>
    %28 = arith.addf %26, %27 : vector<8x128xf32>
    %c0_7 = arith.constant 0 : index
    %c0_8 = arith.constant 0 : index
    %29 = vector.load %arg4[%c0_7, %c0_8] : memref<8x128xf32, #tpu.memory_space<vmem>>, vector<8x128xf32>
    tpu.vector_store %arg4[%c0_7, %c0_8], %28 {strides = array<i32>} : memref<8x128xf32, #tpu.memory_space<vmem>>, vector<8x128xf32>,
    return
  }
  func.func @transform_0(%arg0: i32) -> i32 {
    %c0_i32 = arith.constant 0 : i32
    %c0_i32_0 = arith.constant 0 : i32
    return %c0_i32 : i32
  }
  func.func @transform_1(%arg0: i32) -> i32 {
    %c0_i32 = arith.constant 0 : i32
    %c0_i32_0 = arith.constant 0 : i32
    return %c0_i32 : i32
  }
  func.func @transform_2(%arg0: i32) -> (i32, i32) {
    %c0_i32 = arith.constant 0 : i32
    %c0_i32_0 = arith.constant 0 : i32
    return %arg0, %c0_i32 : i32, i32
  }
  func.func @transform_3(%arg0: i32) -> (i32, i32) {
    %c0_i32 = arith.constant 0 : i32
    %c0_i32_0 = arith.constant 0 : i32
    return %arg0, %c0_i32 : i32, i32
  }
}

</mosaic_0001>

<llo_original>
// kernel: tpu_custom_call.1
$region0: #{tpu_custom_call.1}
  #allocation0 [shape = 'u32[]', space=smem, size = 0x4, offset = 0x4, fixed_abs, tag = 'smem constant byte address 0x4 - core index']
  #allocation1 [shape = 'u32[144,128]{1,0:T(1,128)}', space=vmem, size = 0x12000, scoped, tag = 'internal scratch']
  #allocation2 [shape = 'f32[1]{0:T(128)S(6)}', space=smem, size = 0x200, scoped, tag = 'scoped memory for tpu_custom_call.1']
  #allocation3 [shape = 'f32[1]{0:T(128)S(6)}', space=smem, size = 0x200, scoped, tag = 'scoped memory for tpu_custom_call.1']
  %s0 = inlined_call_operand.<no memory space> [shape: f32[1], index: 0, kind: input, shape index: {}]
  %s1 = inlined_call_operand.<no memory space> [shape: f32[1], index: 1, kind: input, shape index: {}]
  %s2 = inlined_call_operand.hbm [shape: f32[16,128], index: 2, kind: input, shape index: {}]
  %s3 = inlined_call_operand.hbm [shape: f32[16,128], index: 3, kind: output, shape index: {}]
  %s4 = sld [smem:[#allocation0]]
  $region49: #{tpu_custom_call.1} parent=0
    _
  %s6 = ssub.s32 1, %s4
  %s7 = scalar_select 0, %s6, %s4
  %8 = sst [smem:[#allocation2]] %s0
  %9 = sst [smem:[#allocation3]] %s1
  $region1: #{tpu_custom_call.1} parent=0
    #allocation4 [shape = 'u8[8192]{0}', space=vmem, size = 0x2000, scoped, tag = 'input window, operand 2']
    #allocation5 [shape = 's32[2]{0}', space=sflag, size = 0x8, scoped, tag = 'scoped memory for tpu_custom_call.1']
    #allocation6 [shape = 's32[2]{0}', space=sflag, size = 0x8, scoped, tag = 'scoped memory for tpu_custom_call.1']
    #allocation7 [shape = 'u8[8192]{0}', space=vmem, size = 0x2000, scoped, tag = 'output window, operand 0']
    %10 = vsyncpa [#allocation5], 0
    %s11 = scalar_lea.sflag [#allocation5], 1
    %12 = vsyncpa %s11, 0
    %13 = vsyncpa [#allocation6], 0
    %s14 = scalar_lea.sflag [#allocation6], 1
    %15 = vsyncpa %s14, 0
    loop: start=0, step=1, limit=4
    $region2: #{tpu_custom_call.1} parent=1 // loop_pre_header
      _
    $region3: #{tpu_custom_call.1} parent=1 // loop_header
      %s17 = sphi 0, %s21
      %p18 = scmp.ge.s32.totalorder %s17, 4
      %s25 = sphi 0, %s25
      %s27 = sphi 0, %s25
      %s28 = sphi 0, %s27
      %s42 = sphi 0, %s28
      %s46 = sphi 0, %s46
      %s48 = sphi 0, %s46
      %s49 = sphi 0, %s48
      %s63 = sphi 0, %s49
      %s69 = sphi 0, %s71
      %s72 = sphi 0, %s69
      %s73 = sphi 0, %s72
      %s89 = sphi 0, %s73
      %s95 = sphi 0, %s97
      %s98 = sphi 0, %s95
      %s99 = sphi 0, %s98
      %s115 = sphi 0, %s99
    $region4: #{tpu_custom_call.1} parent=1 // loop_header_branch
      %20 = sbr.rel (%p18) target = $region8
    $region5: #{tpu_custom_call.1} parent=1 // loop_body
      %s22 = ssub.s32 %s17, 1
      %s23 = ssub.s32 %s17, 2
      %s24 = sadd.s32 %s17, 1
      %s26 = sadd.s32 %s25, 1
      %p29 = scmp.eq.s32.totalorder %s17, 1
      %p30 = scmp.ne.s32.totalorder %s25, %s27
      %p31 = scmp.eq.s32.totalorder %s17, 0
      %p32 = por %p30, %p31
      %p33 = scmp.ne.s32.totalorder %s25, %s27
      %p34 = scmp.eq.s32.totalorder %s22, 1
      %p35 = por %p33, %p34
      %p36 = scmp.ne.s32.totalorder %s27, %s28
      %p37 = scmp.eq.s32.totalorder %s22, 0
      %p38 = por %p36, %p37
      %p39 = scmp.ne.s32.totalorder %s27, %s28
      %p40 = scmp.eq.s32.totalorder %s23, 1
      %p41 = por %p39, %p40
      %p43 = scmp.ne.s32.totalorder %s28, %s42
      %p44 = scmp.eq.s32.totalorder %s23, 0
      %p45 = por %p43, %p44
      %s47 = sadd.s32 %s46, 1
      %p50 = scmp.eq.s32.totalorder %s17, 1
      %p51 = scmp.ne.s32.totalorder %s46, %s48
      %p52 = scmp.eq.s32.totalorder %s17, 0
      %p53 = por %p51, %p52
      %p54 = scmp.ne.s32.totalorder %s46, %s48
      %p55 = scmp.eq.s32.totalorder %s22, 1
      %p56 = por %p54, %p55
      %p57 = scmp.ne.s32.totalorder %s48, %s49
      %p58 = scmp.eq.s32.totalorder %s22, 0
      %p59 = por %p57, %p58
      %p60 = scmp.ne.s32.totalorder %s48, %s49
      %p61 = scmp.eq.s32.totalorder %s23, 1
      %p62 = por %p60, %p61
      %p64 = scmp.ne.s32.totalorder %s49, %s63
      %p65 = scmp.eq.s32.totalorder %s23, 0
      %p66 = por %p64, %p65
      %s67 = ssub.s32 %s17, %s24
      %p68 = scmp.eq.s32.totalorder %s67, 0
      %s70 = sadd.s32 %s69, 1
      %s71 = scalar_select %p68, %s69, %s70
      %p74 = pneg %p68
      %p75 = scmp.eq.s32.totalorder %s17, 1
      %p76 = por %p74, %p75
      %p77 = scmp.ne.s32.totalorder %s69, %s72
      %p78 = scmp.eq.s32.totalorder %s17, 0
      %p79 = por %p77, %p78
      %p80 = scmp.ne.s32.totalorder %s69, %s72
      %p81 = scmp.eq.s32.totalorder %s22, 1
      %p82 = por %p80, %p81
      %p83 = scmp.ne.s32.totalorder %s72, %s73
      %p84 = scmp.eq.s32.totalorder %s22, 0
      %p85 = por %p83, %p84
      %p86 = scmp.ne.s32.totalorder %s72, %s73
      %p87 = scmp.eq.s32.totalorder %s23, 1
      %p88 = por %p86, %p87
      %p90 = scmp.ne.s32.totalorder %s73, %s89
      %p91 = scmp.eq.s32.totalorder %s23, 0
      %p92 = por %p90, %p91
      %s93 = ssub.s32 %s17, %s24
      %p94 = scmp.eq.s32.totalorder %s93, 0
      %s96 = sadd.s32 %s95, 1
      %s97 = scalar_select %p94, %s95, %s96
      %p100 = pneg %p94
      %p101 = scmp.eq.s32.totalorder %s17, 1
      %p102 = por %p100, %p101
      %p103 = scmp.ne.s32.totalorder %s95, %s98
      %p104 = scmp.eq.s32.totalorder %s17, 0
      %p105 = por %p103, %p104
      %p106 = scmp.ne.s32.totalorder %s95, %s98
      %p107 = scmp.eq.s32.totalorder %s22, 1
      %p108 = por %p106, %p107
      %p109 = scmp.ne.s32.totalorder %s98, %s99
      %p110 = scmp.eq.s32.totalorder %s22, 0
      %p111 = por %p109, %p110
      %p112 = scmp.ne.s32.totalorder %s98, %s99
      %p113 = scmp.eq.s32.totalorder %s23, 1
      %p114 = por %p112, %p113
      %p116 = scmp.ne.s32.totalorder %s99, %s115
      %p117 = scmp.eq.s32.totalorder %s23, 0
      %p118 = por %p116, %p117
      %p119 = scmp.le.s32.totalorder 1, %s17
      %p120 = scmp.lt.s32.totalorder %s17, 3
      %p121 = pnand %p119, %p120
      %p122 = pneg %p121
      // Predicated region
      $region9: #{tpu_custom_call.1} parent=5 // pred_check
        _
      $region10: #{tpu_custom_call.1} parent=5 // pred_check_branch
        %124 = sbr.rel (%p121) target = $region12
      $region11: #{tpu_custom_call.1} parent=5 // pred_region
        %s125 = ssub.s32 %s17, 1
        // Predicated region
        $region13: #{tpu_custom_call.1} parent=11 // pred_check
          %p126 = pneg %p38
        $region14: #{tpu_custom_call.1} parent=11 // pred_check_branch
          %128 = sbr.rel (%p126) target = $region16
        $region15: #{tpu_custom_call.1} parent=11 // pred_region
          _
        $region16: #{tpu_custom_call.1} parent=11 // pred_fallthru
          _
        // Predicated region
        $region17: #{tpu_custom_call.1} parent=11 // pred_check
          %p129 = pneg %p59
        $region18: #{tpu_custom_call.1} parent=11 // pred_check_branch
          %131 = sbr.rel (%p129) target = $region20
        $region19: #{tpu_custom_call.1} parent=11 // pred_region
          _
        $region20: #{tpu_custom_call.1} parent=11 // pred_fallthru
          _
      $region12: #{tpu_custom_call.1} parent=5 // pred_fallthru
        _
      %p132 = scmp.lt.s32.totalorder %s17, 2
      // Predicated region
      $region21: #{tpu_custom_call.1} parent=5 // pred_check
        %p133 = pneg %p132
      $region22: #{tpu_custom_call.1} parent=5 // pred_check_branch
        %135 = sbr.rel (%p133) target = $region24
      $region23: #{tpu_custom_call.1} parent=5 // pred_region
        // Predicated region
        $region25: #{tpu_custom_call.1} parent=23 // pred_check
          %p136 = pneg %p79
        $region26: #{tpu_custom_call.1} parent=23 // pred_check_branch
          %138 = sbr.rel (%p136) target = $region28
        $region27: #{tpu_custom_call.1} parent=23 // pred_region
          %s139 = sand.u32 %s69, 1
          %s140 = scalar_lea.sflag [#allocation5], %s139
          %s141 = sand.u32 %s69, 1
          %s142 = smul.addr %s141, 8
          %s143 = scalar_lea.vmem [#allocation4], %s142
          %s145 = ssub.s32 128, 128
          %146 = vsyncadd %s140, %s145
          %s147 = smul.addr %s17, 128
          %s148 = scalar_lea.hbm %s2, %s147
          %s150 = sshll.u32 %s143, 4
          %s151 = int_to_ptr.vmem [resolvable:$true] %s150
          %153 = dma.hbm_to_vmem [thread:$0]  %s148, 128, %s151, %s140
        $region28: #{tpu_custom_call.1} parent=23 // pred_fallthru
          _
      $region24: #{tpu_custom_call.1} parent=5 // pred_fallthru
        _
      %p154 = scmp.le.s32.totalorder 1, %s17
      %p155 = scmp.lt.s32.totalorder %s17, 3
      %p156 = pnand %p154, %p155
      %p157 = pneg %p156
      // Predicated region
      $region29: #{tpu_custom_call.1} parent=5 // pred_check
        _
      $region30: #{tpu_custom_call.1} parent=5 // pred_check_branch
        %159 = sbr.rel (%p156) target = $region32
      $region31: #{tpu_custom_call.1} parent=5 // pred_region
        %s160 = ssub.s32 %s17, 1
        %s161 = sand.u32 %s72, 1
        %s162 = scalar_lea.sflag [#allocation5], %s161
        %s163 = sand.u32 %s72, 1
        %s164 = smul.addr %s163, 8
        %s165 = scalar_lea.vmem [#allocation4], %s164
        // Predicated region
        $region33: #{tpu_custom_call.1} parent=31 // pred_check
          %p166 = pneg %p85
        $region34: #{tpu_custom_call.1} parent=31 // pred_check_branch
          %168 = sbr.rel (%p166) target = $region36
        $region35: #{tpu_custom_call.1} parent=31 // pred_region
          %169 = dma.done %s162, 128
        $region36: #{tpu_custom_call.1} parent=31 // pred_fallthru
          _
        %p170 = pneg %p38
        %p171 = pneg %p35
        %p172 = pneg %p59
        %p173 = pneg %p56
        %s174 = sand.u32 %s72, 1
        %s175 = scalar_lea.sflag [#allocation5], %s174
        %s176 = sand.u32 %s72, 1
        %s177 = smul.addr %s176, 8
        %s178 = scalar_lea.vmem [#allocation4], %s177
        %p179 = pneg %p85
        %p180 = pneg %p82
        %p181 = pneg %p111
        %p182 = pneg %p108
        %s183 = sand.u32 %s98, 1
        %s184 = scalar_lea.sflag [#allocation6], %s183
        %s185 = sand.u32 %s98, 1
        %s186 = smul.addr %s185, 8
        %s187 = scalar_lea.vmem [#allocation7], %s186
        %v188 = vld [vmem:[%s165] sm:$0xff]
        %189 = vadd.xlane.f32.xlu0 %v188
        %v190 = vpop.xlane.xlu0 %189
        %v191 = vrcp.pop 128.0
        %v192 = vmul.f32 %v190, %v191
        %v193 = vsub.f32 %v188, %v192
        %v194 = vmul.f32 %v193, %v193
        %195 = vadd.xlane.f32.xlu0 %v194
        %v196 = vpop.xlane.xlu0 %195
        %v197 = vrcp.pop 127.0
        %v198 = vmul.f32 %v196, %v197
        %v199 = vrsqrt.pop %v198
        %v200 = vmul.f32 %v198, %v199
        %vm201 = vcmp.eq.f32.partialorder %v198, inf
        %v202 = vsel %vm201, %v198, %v200
        %vm203 = vcmp.eq.f32.partialorder %v198, 0.0
        %v204 = vand.u32 %v198, 2147483648
        %v205 = vsel %vm203, %v204, %v202
        %s206 = sld [smem:[#allocation2]]
        %s207 = sld [smem:[#allocation3]]
        %v208 = vadd.f32 %v205, 1e-06
        %v209 = vrcp.pop %v208
        %v210 = vstv %s206
        %v211 = vmul.f32 %v210, %v209
        %v212 = vmul.f32 %v192, %v211
        %v213 = vstv %s207
        %v214 = vsub.f32 %v213, %v212
        %v215 = vmul.f32 %v188, %v211
        %v216 = vadd.f32 %v215, %v214
        %217 = vst [vmem:[%s187] sm:$0xff] %v216
        %s218 = sand.u32 %s98, 1
        %s219 = scalar_lea.sflag [#allocation6], %s218
        %s220 = sand.u32 %s98, 1
        %s221 = smul.addr %s220, 8
        %s222 = scalar_lea.vmem [#allocation7], %s221
        // Predicated region
        $region37: #{tpu_custom_call.1} parent=31 // pred_check
          %p223 = pneg %p108
        $region38: #{tpu_custom_call.1} parent=31 // pred_check_branch
          %225 = sbr.rel (%p223) target = $region40
        $region39: #{tpu_custom_call.1} parent=31 // pred_region
          %s227 = ssub.s32 128, 128
          %228 = vsyncadd %s219, %s227
          %s229 = smul.addr %s22, 128
          %s230 = scalar_lea.hbm %s3, %s229
          %s232 = sshll.u32 %s222, 4
          %s233 = int_to_ptr.vmem [resolvable:$true] %s232
          %235 = dma.vmem_to_hbm [thread:$0]  %s233, 128, %s230, %s219
        $region40: #{tpu_custom_call.1} parent=31 // pred_fallthru
          _
      $region32: #{tpu_custom_call.1} parent=5 // pred_fallthru
        _
      %p236 = scmp.le.s32.totalorder 2, %s17
      // Predicated region
      $region41: #{tpu_custom_call.1} parent=5 // pred_check
        %p237 = pneg %p236
      $region42: #{tpu_custom_call.1} parent=5 // pred_check_branch
        %239 = sbr.rel (%p237) target = $region44
      $region43: #{tpu_custom_call.1} parent=5 // pred_region
        %s240 = ssub.s32 %s17, 2
        // Predicated region
        $region45: #{tpu_custom_call.1} parent=43 // pred_check
          %p241 = pneg %p114
        $region46: #{tpu_custom_call.1} parent=43 // pred_check_branch
          %243 = sbr.rel (%p241) target = $region48
        $region47: #{tpu_custom_call.1} parent=43 // pred_region
          %s244 = sand.u32 %s99, 1
          %s245 = scalar_lea.sflag [#allocation6], %s244
          %s246 = sand.u32 %s99, 1
          %s247 = smul.addr %s246, 8
          %s248 = scalar_lea.vmem [#allocation7], %s247
          %249 = dma.done %s245, 128
        $region48: #{tpu_custom_call.1} parent=43 // pred_fallthru
          _
      $region44: #{tpu_custom_call.1} parent=5 // pred_fallthru
        _
    $region6: #{tpu_custom_call.1} parent=1 // loop_footer
      %s21 = sadd.s32 1, %s17
    $region7: #{tpu_custom_call.1} parent=1 // loop_footer_branch
      %16 = sbr.rel target = $region3
    $region8: #{tpu_custom_call.1} parent=1 // loop_exit
      _
    %250 = vsyncpa [#allocation5], 1
    %s251 = scalar_lea.sflag [#allocation5], 1
    %252 = vsyncpa %s251, 1
    %253 = vsyncpa [#allocation6], 1
    %s254 = scalar_lea.sflag [#allocation6], 1
    %255 = vsyncpa %s254, 1

</llo_original>
